<compile_context>
chip_gen: v6e
topology: v6e:2x2x1
jax: 0.10.0
libtpu: 0.0.40
codegen_flags: <defaults>
</compile_context>

<pallas_src>
import jax
import jax.numpy as jnp
from jax import lax
from jax.experimental import pallas as pl
from jax.experimental.pallas import tpu as pltpu

HIER_LAMBDA = 1e-05
REG_LAMBDA = 0
VOL_LAMBDA = 1

_LANES = 128
_SUBLANES = 8


def _round_up(x, m):
    return ((x + m - 1) // m) * m


def _vmem_budget():
    """(pipelined-VMEM budget for input blocks, vmem_limit_bytes) per chip gen."""
    cap = None
    try:
        info = pltpu.get_tpu_info()
        cap = getattr(info, "vmem_capacity_bytes", None)
    except Exception:
        cap = None
    if cap is None:
        cap = 64 << 20  # conservative default == v7x per-TC capacity
    if cap >= (96 << 20):        # v5e / v6e: 128 MiB physical VMEM
        return 48 << 20, 64 << 20
    return 24 << 20, 40 << 20    # v7x: 64 MiB per TensorCore


def _auto_row_block(B, T, itemsizes, budget_bytes, align):
    """Sublane-aligned row block sized to the pipelined-VMEM budget."""
    if B <= align:
        return B  # single full-height block (full array dim is always legal)
    bytes_per_row = 2 * T * sum(itemsizes)  # double-buffered, all 5 streams
    cap_rows = max(align, budget_bytes // max(bytes_per_row, 1))
    rb = min(cap_rows, B)
    rb = max(align, (rb // align) * align)
    # Prefer >= 2 grid steps so "parallel" can split across v7x's two TCs.
    if rb >= B:
        half = _round_up((B + 1) // 2, align)
        rb = max(align, min(rb, half))
    return rb


# ----------------------------------------------------------------------------
# Kernel 1: masked-SSE hot path, tiled along B, per-tile lane-dense partials.
# ----------------------------------------------------------------------------
def _make_masked_sse_kernel(B, row_block, has_tail):
    def kernel(yh_ref, y_ref, yvh_ref, yv_ref, m_ref, out_ref):
        # Casts happen in-kernel on the VPU (HBM only moves native-dtype bytes).
        m = m_ref[...].astype(jnp.float32)
        d_nr = yh_ref[...].astype(jnp.float32) - y_ref[...].astype(jnp.float32)
        d_vol = yvh_ref[...].astype(jnp.float32) - yv_ref[...].astype(jnp.float32)
        nr_sq = d_nr * d_nr * m
        vol_sq = d_vol * d_vol * m
        if has_tail:
            # Tail block of a non-divisible B: select out rows >= B (select,
            # not multiply, so NaN/Inf garbage in the OOB tail cannot leak).
            row0 = pl.program_id(0) * row_block
            row = row0 + lax.broadcasted_iota(jnp.int32, nr_sq.shape, 0)
            valid = row < B
            nr_sq = jnp.where(valid, nr_sq, 0.0)
            vol_sq = jnp.where(valid, vol_sq, 0.0)
        nr = jnp.sum(nr_sq)
        vol = jnp.sum(vol_sq)
        # Lane-dense partial-sum row: lane 0 -> nr, lane 1 -> vol, rest zero.
        lane = lax.broadcasted_iota(jnp.int32, (1, 1, _LANES), 2)
        out_ref[...] = jnp.where(lane == 0, nr, jnp.where(lane == 1, vol, 0.0))

    return kernel


def masked_sse(y_hat, y, y_vol_hat, y_vol, mask, *, row_block=None):
    """Returns (sum((y_hat-y)^2*mask), sum((y_vol_hat-y_vol)^2*mask)) as f32."""
    B, T = y_hat.shape
    inputs = (y_hat, y, y_vol_hat, y_vol, mask)
    itemsizes = [jnp.dtype(a.dtype).itemsize for a in inputs]
    # Sublane packing: 8 rows/vreg for 4-byte, 16 for 2-byte, 32 for 1-byte.
    align = max((_SUBLANES * 4) // s for s in itemsizes)
    budget_bytes, vmem_limit = _vmem_budget()

    if row_block is None:
        row_block = _auto_row_block(B, T, itemsizes, budget_bytes, align)
    else:
        row_block = max(1, min(int(row_block), B))
        if row_block != B:
            row_block = min(B, max(_SUBLANES, (row_block // _SUBLANES) * _SUBLANES))

    num_tiles = pl.cdiv(B, row_block)
    has_tail = (B % row_block) != 0

    in_spec = pl.BlockSpec((row_block, T), lambda i: (i, 0))
    out_spec = pl.BlockSpec((1, 1, _LANES), lambda i: (i, 0, 0))

    bytes_accessed = sum(B * T * s for s in itemsizes) + num_tiles * _LANES * 4
    cost = pl.CostEstimate(
        flops=8 * B * T, transcendentals=0, bytes_accessed=bytes_accessed
    )

    partials = pl.pallas_call(
        _make_masked_sse_kernel(B, row_block, has_tail),
        out_shape=jax.ShapeDtypeStruct((num_tiles, 1, _LANES), jnp.float32),
        grid_spec=pltpu.PrefetchScalarGridSpec(
            num_scalar_prefetch=0,
            grid=(num_tiles,),
            in_specs=[in_spec, in_spec, in_spec, in_spec, in_spec],
            out_specs=out_spec,
        ),
        compiler_params=pltpu.CompilerParams(
            dimension_semantics=("parallel",),  # megacore / v7x 2-TC sharding
            vmem_limit_bytes=vmem_limit,
        ),
        cost_estimate=cost,
    )(y_hat, y, y_vol_hat, y_vol, mask)

    partials = partials.reshape(num_tiles, _LANES)
    return jnp.sum(partials[:, 0]), jnp.sum(partials[:, 1])


# ----------------------------------------------------------------------------
# Kernel 2: one fused, row-tiled weighted sum-of-squares over ALL parameters.
#   hier_loss = sum(rowsum(x^2) * wh)  (wh = 1/numel for hier param rows, else 0)
#   l2_loss   = sum(rowsum(x^2) * wl)  (wl = 1 for global param rows, else 0)
# ----------------------------------------------------------------------------
def _param_sq_kernel(x_ref, wh_ref, wl_ref, out_ref):
    x = x_ref[...].astype(jnp.float32)          # native dtype on HBM, cast here
    row_sq = jnp.sum(x * x, axis=1, keepdims=True)   # (row_tile, 1)
    hier = jnp.sum(row_sq * wh_ref[...])
    l2 = jnp.sum(row_sq * wl_ref[...])
    lane = lax.broadcasted_iota(jnp.int32, (1, 1, _LANES), 2)
    out_ref[...] = jnp.where(lane == 0, hier, jnp.where(lane == 1, l2, 0.0))


def param_losses(hier_params, global_params, *, row_tile=256):
    chunks, wh_rows, wl_rows = [], [], []

    def add(p, is_hier):
        flat = jnp.ravel(p)
        n = int(flat.shape[0])
        if n == 0:
            return
        r = pl.cdiv(n, _LANES)
        chunks.append(jnp.pad(flat, (0, r * _LANES - n)))  # row-align each chunk
        if is_hier:
            wh_rows.append(jnp.full((r, 1), 1.0 / n, jnp.float32))
            wl_rows.append(jnp.zeros((r, 1), jnp.float32))
        else:
            wh_rows.append(jnp.zeros((r, 1), jnp.float32))
            wl_rows.append(jnp.ones((r, 1), jnp.float32))

    for p in hier_params:
        add(p, True)
    for p in global_params:
        add(p, False)

    if not chunks:
        z = jnp.float32(0.0)
        return z, z

    x = jnp.concatenate(chunks)  # native dtype (no wrapper f32 cast)
    rows = x.shape[0] // _LANES
    row_tile = min(int(row_tile), _round_up(rows, _SUBLANES))
    row_tile = max(_SUBLANES, (row_tile // _SUBLANES) * _SUBLANES)
    rows_p = _round_up(rows, row_tile)

    x = jnp.pad(x, (0, (rows_p - rows) * _LANES)).reshape(rows_p, _LANES)
    wh = jnp.pad(jnp.concatenate(wh_rows), ((0, rows_p - rows), (0, 0)))
    wl = jnp.pad(jnp.concatenate(wl_rows), ((0, rows_p - rows), (0, 0)))

    num_tiles = rows_p // row_tile
    x_spec = pl.BlockSpec((row_tile, _LANES), lambda i: (i, 0))
    w_spec = pl.BlockSpec((row_tile, 1), lambda i: (i, 0))
    out_spec = pl.BlockSpec((1, 1, _LANES), lambda i: (i, 0, 0))

    partials = pl.pallas_call(
        _param_sq_kernel,
        out_shape=jax.ShapeDtypeStruct((num_tiles, 1, _LANES), jnp.float32),
        grid_spec=pltpu.PrefetchScalarGridSpec(
            num_scalar_prefetch=0,
            grid=(num_tiles,),
            in_specs=[x_spec, w_spec, w_spec],
            out_specs=out_spec,
        ),
        compiler_params=pltpu.CompilerParams(
            dimension_semantics=("parallel",),
            vmem_limit_bytes=32 << 20,
        ),
    )(x, wh, wl)

    partials = partials.reshape(num_tiles, _LANES)
    return jnp.sum(partials[:, 0]), jnp.sum(partials[:, 1])


# ----------------------------------------------------------------------------
# Wrapper reproducing HierarchicalLoss.forward semantics.
# ----------------------------------------------------------------------------
def hierarchical_loss(y_hat, y, y_vol_hat, y_vol, mask, hier_params,
                      global_params, *, row_block=None):
    n_elem = jnp.float32(y_hat.size)

    nr_sum, vol_sum = masked_sse(
        y_hat, y, y_vol_hat, y_vol, mask, row_block=row_block
    )
    nr_loss = nr_sum / n_elem
    vol_loss = vol_sum / n_elem

    hier_loss, l2_loss = param_losses(hier_params, global_params)

    total_loss = (
        nr_loss
        + VOL_LAMBDA * vol_loss
        + HIER_LAMBDA * hier_loss
        + REG_LAMBDA * l2_loss
    )
    metrics = {
        "nr_loss": nr_loss,
        "vol_loss": vol_loss,
        "l2_loss": l2_loss,
        "hier_loss": hier_loss,
        "total_loss": total_loss,
    }
    return total_loss, metrics


if __name__ == "__main__":
    key = jax.random.PRNGKey(0)
    ks = jax.random.split(key, 10)

    # B deliberately NOT a multiple of the auto row block -> exercises the
    # cdiv grid + in-kernel tail masking path.
    B, T = 48, 256

    # bf16 value streams (kernel casts to f32 internally); int8 mask (1 B/elem).
    y_hat = jax.random.normal(ks[0], (B, T), dtype=jnp.float32).astype(jnp.bfloat16)
    y = jax.random.normal(ks[1], (B, T), dtype=jnp.float32).astype(jnp.bfloat16)
    y_vol_hat = jax.random.normal(ks[2], (B, T), dtype=jnp.float32).astype(jnp.bfloat16)
    y_vol = jax.random.normal(ks[3], (B, T), dtype=jnp.float32).astype(jnp.bfloat16)
    mask = (jax.random.uniform(ks[4], (B, T)) > 0.3).astype(jnp.int8)

    hier_params = [
        jax.random.normal(ks[5], (8, 32), dtype=jnp.float32) * 0.1,
        jax.random.normal(ks[6], (4, 64), dtype=jnp.float32) * 0.1,
        jax.random.normal(ks[7], (100,), dtype=jnp.float32) * 0.1,
    ]
    global_params = [
        jax.random.normal(ks[8], (32,), dtype=jnp.float32) * 0.1,
        jax.random.normal(ks[9], (16, 16), dtype=jnp.float32) * 0.1,
    ]

    total, metrics = hierarchical_loss(
        y_hat, y, y_vol_hat, y_vol, mask, hier_params, global_params
    )
    total = jax.block_until_ready(total)

    # Pure-JAX reference of the PyTorch semantics (same f32 accumulation).
    yh32, y32 = y_hat.astype(jnp.float32), y.astype(jnp.float32)
    yvh32, yv32 = y_vol_hat.astype(jnp.float32), y_vol.astype(jnp.float32)
    m32 = mask.astype(jnp.float32)
    nr_ref = jnp.mean(((yh32 - y32) ** 2) * m32)
    vol_ref = jnp.mean(((yvh32 - yv32) ** 2) * m32)
    l2_ref = sum(jnp.sum(p.astype(jnp.float32) ** 2) for p in global_params)
    hier_ref = sum(jnp.mean(p.astype(jnp.float32) ** 2) for p in hier_params)
    total_ref = (
        nr_ref + VOL_LAMBDA * vol_ref + HIER_LAMBDA * hier_ref + REG_LAMBDA * l2_ref
    )

    assert jnp.allclose(metrics["nr_loss"], nr_ref, rtol=1e-5, atol=1e-6)
    assert jnp.allclose(metrics["vol_loss"], vol_ref, rtol=1e-5, atol=1e-6)
    assert jnp.allclose(metrics["hier_loss"], hier_ref, rtol=1e-5, atol=1e-6)
    assert jnp.allclose(metrics["l2_loss"], l2_ref, rtol=1e-5, atol=1e-6)
    assert jnp.allclose(total, total_ref, rtol=1e-5, atol=1e-6), (total, total_ref)

    print("KERNEL_OK")
</pallas_src>

<mosaic_0001>
module attributes {stable_mosaic.version = 11 : i64} {
  func.func @kernel(%arg0: i32, %arg1: memref<32x256xbf16, #tpu.memory_space<vmem>>, %arg2: memref<32x256xbf16, #tpu.memory_space<vmem>>, %arg3: memref<32x256xbf16, #tpu.memory_space<vmem>>, %arg4: memref<32x256xbf16, #tpu.memory_space<vmem>>, %arg5: memref<32x256xi8, #tpu.memory_space<vmem>>, %arg6: memref<1x1x128xf32, #tpu.memory_space<vmem>>) attributes {dimension_semantics = [#tpu.dimension_semantics<parallel>], iteration_bounds = array<i64: 2>, scalar_prefetch = 0 : i64, scratch_operands = 0 : i64, tpu.core_type = #tpu.core_type<tc>, window_params = [{transform_indices = @transform_0, window_bounds = array<i64: 32, 256>}, {transform_indices = @transform_1, window_bounds = array<i64: 32, 256>}, {transform_indices = @transform_2, window_bounds = array<i64: 32, 256>}, {transform_indices = @transform_3, window_bounds = array<i64: 32, 256>}, {transform_indices = @transform_4, window_bounds = array<i64: 32, 256>}, {transform_indices = @transform_5, window_bounds = array<i64: 1, 1, 128>}]} {
    %c0 = arith.constant 0 : index
    %c0_0 = arith.constant 0 : index
    %0 = vector.load %arg5[%c0, %c0_0] : memref<32x256xi8, #tpu.memory_space<vmem>>, vector<32x256xi8>
    %1 = arith.sitofp %0 : vector<32x256xi8> to vector<32x256xf32>
    %c0_1 = arith.constant 0 : index
    %c0_2 = arith.constant 0 : index
    %2 = vector.load %arg1[%c0_1, %c0_2] : memref<32x256xbf16, #tpu.memory_space<vmem>>, vector<32x256xbf16>
    %3 = arith.extf %2 : vector<32x256xbf16> to vector<32x256xf32>
    %c0_3 = arith.constant 0 : index
    %c0_4 = arith.constant 0 : index
    %4 = vector.load %arg2[%c0_3, %c0_4] : memref<32x256xbf16, #tpu.memory_space<vmem>>, vector<32x256xbf16>
    %5 = arith.extf %4 : vector<32x256xbf16> to vector<32x256xf32>
    %6 = arith.subf %3, %5 : vector<32x256xf32>
    %c0_5 = arith.constant 0 : index
    %c0_6 = arith.constant 0 : index
    %7 = vector.load %arg3[%c0_5, %c0_6] : memref<32x256xbf16, #tpu.memory_space<vmem>>, vector<32x256xbf16>
    %8 = arith.extf %7 : vector<32x256xbf16> to vector<32x256xf32>
    %c0_7 = arith.constant 0 : index
    %c0_8 = arith.constant 0 : index
    %9 = vector.load %arg4[%c0_7, %c0_8] : memref<32x256xbf16, #tpu.memory_space<vmem>>, vector<32x256xbf16>
    %10 = arith.extf %9 : vector<32x256xbf16> to vector<32x256xf32>
    %11 = arith.subf %8, %10 : vector<32x256xf32>
    %12 = arith.mulf %6, %6 : vector<32x256xf32>
    %13 = arith.mulf %12, %1 : vector<32x256xf32>
    %14 = arith.mulf %11, %11 : vector<32x256xf32>
    %15 = arith.mulf %14, %1 : vector<32x256xf32>
    %c32_i32 = arith.constant 32 : i32
    %16 = arith.muli %arg0, %c32_i32 : i32
    %17 = tpu.iota {dimensions = array<i32: 0>} : vector<32x256xi32>
    %18 = vector.broadcast %16 : i32 to vector<32x256xi32>
    %19 = arith.addi %18, %17 : vector<32x256xi32>
    %c48_i32 = arith.constant 48 : i32
    %20 = vector.broadcast %c48_i32 : i32 to vector<32x256xi32>
    %21 = arith.cmpi slt, %19, %20 : vector<32x256xi32>
    %cst = arith.constant 0.000000e+00 : f32
    %22 = vector.broadcast %cst : f32 to vector<32x256xf32>
    %23 = arith.select %21, %13, %22 : vector<32x256xi1>, vector<32x256xf32>
    %cst_9 = arith.constant 0.000000e+00 : f32
    %24 = vector.broadcast %cst_9 : f32 to vector<32x256xf32>
    %25 = arith.select %21, %15, %24 : vector<32x256xi1>, vector<32x256xf32>
    %26 = vector.shape_cast %23 : vector<32x256xf32> to vector<1x32x256xf32>
    %cst_10 = arith.constant dense<0.000000e+00> : vector<1xf32>
    %27 = vector.multi_reduction <add>, %26, %cst_10 [1, 2] : vector<1x32x256xf32> to vector<1xf32>
    %28 = vector.shape_cast %27 : vector<1xf32> to vector<1x1x1xf32>
    %29 = vector.extract %28[0, 0, 0] : f32 from vector<1x1x1xf32>
    %30 = vector.shape_cast %25 : vector<32x256xf32> to vector<1x32x256xf32>
    %cst_11 = arith.constant dense<0.000000e+00> : vector<1xf32>
    %31 = vector.multi_reduction <add>, %30, %cst_11 [1, 2] : vector<1x32x256xf32> to vector<1xf32>
    %32 = vector.shape_cast %31 : vector<1xf32> to vector<1x1x1xf32>
    %33 = vector.extract %32[0, 0, 0] : f32 from vector<1x1x1xf32>
    %34 = tpu.iota {dimensions = array<i32: 2>} : vector<1x1x128xi32>
    %c0_i32 = arith.constant 0 : i32
    %35 = vector.broadcast %c0_i32 : i32 to vector<1x1x128xi32>
    %36 = arith.cmpi eq, %34, %35 : vector<1x1x128xi32>
    %c1_i32 = arith.constant 1 : i32
    %37 = vector.broadcast %c1_i32 : i32 to vector<1x1x128xi32>
    %38 = arith.cmpi eq, %34, %37 : vector<1x1x128xi32>
    %cst_12 = arith.constant 0.000000e+00 : f32
    %39 = vector.broadcast %33 : f32 to vector<1x1x128xf32>
    %40 = vector.broadcast %cst_12 : f32 to vector<1x1x128xf32>
    %41 = arith.select %38, %39, %40 : vector<1x1x128xi1>, vector<1x1x128xf32>
    %42 = vector.broadcast %29 : f32 to vector<1x1x128xf32>
    %43 = arith.select %36, %42, %41 : vector<1x1x128xi1>, vector<1x1x128xf32>
    %c0_13 = arith.constant 0 : index
    %c0_14 = arith.constant 0 : index
    %c0_15 = arith.constant 0 : index
    %44 = vector.load %arg6[%c0_13, %c0_14, %c0_15] : memref<1x1x128xf32, #tpu.memory_space<vmem>>, vector<1x1x128xf32>
    tpu.vector_store %arg6[%c0_13, %c0_14, %c0_15], %43 {strides = array<i32>} : memref<1x1x128xf32, #tpu.memory_space<vmem>>, vector<1x1x128xf32>,
    return
  }
  func.func @transform_0(%arg0: i32) -> (i32, i32) {
    %c0_i32 = arith.constant 0 : i32
    %c0_i32_0 = arith.constant 0 : i32
    return %arg0, %c0_i32 : i32, i32
  }
  func.func @transform_1(%arg0: i32) -> (i32, i32) {
    %c0_i32 = arith.constant 0 : i32
    %c0_i32_0 = arith.constant 0 : i32
    return %arg0, %c0_i32 : i32, i32
  }
  func.func @transform_2(%arg0: i32) -> (i32, i32) {
    %c0_i32 = arith.constant 0 : i32
    %c0_i32_0 = arith.constant 0 : i32
    return %arg0, %c0_i32 : i32, i32
  }
  func.func @transform_3(%arg0: i32) -> (i32, i32) {
    %c0_i32 = arith.constant 0 : i32
    %c0_i32_0 = arith.constant 0 : i32
    return %arg0, %c0_i32 : i32, i32
  }
  func.func @transform_4(%arg0: i32) -> (i32, i32) {
    %c0_i32 = arith.constant 0 : i32
    %c0_i32_0 = arith.constant 0 : i32
    return %arg0, %c0_i32 : i32, i32
  }
  func.func @transform_5(%arg0: i32) -> (i32, i32, i32) {
    %c0_i32 = arith.constant 0 : i32
    %c0_i32_0 = arith.constant 0 : i32
    %c0_i32_1 = arith.constant 0 : i32
    return %arg0, %c0_i32, %c0_i32_0 : i32, i32, i32
  }
}

</mosaic_0001>

<llo_original>
// kernel: tpu_custom_call.1
$region0: #{tpu_custom_call.1}
  #allocation0 [shape = 'u32[]', space=smem, size = 0x4, offset = 0x4, fixed_abs, tag = 'smem constant byte address 0x4 - core index']
  #allocation1 [shape = 'u32[144,128]{1,0:T(1,128)}', space=vmem, size = 0x12000, scoped, tag = 'internal scratch']
  %s0 = inlined_call_operand.hbm [shape: bf16[48,256], index: 0, kind: input, shape index: {}]
  %s1 = inlined_call_operand.hbm [shape: bf16[48,256], index: 1, kind: input, shape index: {}]
  %s2 = inlined_call_operand.hbm [shape: bf16[48,256], index: 2, kind: input, shape index: {}]
  %s3 = inlined_call_operand.hbm [shape: bf16[48,256], index: 3, kind: input, shape index: {}]
  %s4 = inlined_call_operand.hbm [shape: s8[48,256], index: 4, kind: input, shape index: {}]
  %s5 = inlined_call_operand.hbm [shape: f32[2,1,128], index: 5, kind: output, shape index: {}]
  %s6 = sld [smem:[#allocation0]]
  $region73: #{tpu_custom_call.1} parent=0
    _
  %s8 = ssub.s32 1, %s6
  %s9 = scalar_select 0, %s8, %s6
  $region1: #{tpu_custom_call.1} parent=0
    #allocation2 [shape = 'u8[32768]{0}', space=vmem, size = 0x8000, scoped, tag = 'input window, operand 0']
    #allocation3 [shape = 's32[2]{0}', space=sflag, size = 0x8, scoped, tag = 'scoped memory for tpu_custom_call.1']
    #allocation4 [shape = 's32[2]{0}', space=sflag, size = 0x8, scoped, tag = 'scoped memory for tpu_custom_call.1']
    #allocation5 [shape = 'u8[32768]{0}', space=vmem, size = 0x8000, scoped, tag = 'input window, operand 1']
    #allocation6 [shape = 's32[2]{0}', space=sflag, size = 0x8, scoped, tag = 'scoped memory for tpu_custom_call.1']
    #allocation7 [shape = 'u8[32768]{0}', space=vmem, size = 0x8000, scoped, tag = 'input window, operand 2']
    #allocation8 [shape = 'u8[32768]{0}', space=vmem, size = 0x8000, scoped, tag = 'input window, operand 3']
    #allocation9 [shape = 's32[2]{0}', space=sflag, size = 0x8, scoped, tag = 'scoped memory for tpu_custom_call.1']
    #allocation10 [shape = 'u8[16384]{0}', space=vmem, size = 0x4000, scoped, tag = 'input window, operand 4']
    #allocation11 [shape = 'u8[1024]{0}', space=vmem, size = 0x400, scoped, tag = 'output window, operand 0']
    %10 = vsyncpa [#allocation3], 0
    %s11 = scalar_lea.sflag [#allocation3], 1
    %12 = vsyncpa %s11, 0
    %13 = vsyncpa [#allocation6], 0
    %s14 = scalar_lea.sflag [#allocation6], 1
    %15 = vsyncpa %s14, 0
    %16 = vsyncpa [#allocation9], 0
    %s17 = scalar_lea.sflag [#allocation9], 1
    %18 = vsyncpa %s17, 0
    %19 = vsyncpa [#allocation4], 0
    %s20 = scalar_lea.sflag [#allocation4], 1
    %21 = vsyncpa %s20, 0
    loop: start=0, step=1, limit=4
    $region2: #{tpu_custom_call.1} parent=1 // loop_pre_header
      _
    $region3: #{tpu_custom_call.1} parent=1 // loop_header
      %s23 = sphi 0, %s27
      %p24 = scmp.ge.s32.totalorder %s23, 4
      %s33 = sphi 0, %s35
      %s36 = sphi 0, %s33
      %s37 = sphi 0, %s36
      %s53 = sphi 0, %s37
      %s59 = sphi 0, %s61
      %s62 = sphi 0, %s59
      %s63 = sphi 0, %s62
      %s79 = sphi 0, %s63
      %s85 = sphi 0, %s87
      %s88 = sphi 0, %s85
      %s89 = sphi 0, %s88
      %s105 = sphi 0, %s89
      %s111 = sphi 0, %s113
      %s114 = sphi 0, %s111
      %s115 = sphi 0, %s114
      %s131 = sphi 0, %s115
      %s137 = sphi 0, %s139
      %s140 = sphi 0, %s137
      %s141 = sphi 0, %s140
      %s157 = sphi 0, %s141
      %s163 = sphi 0, %s165
      %s166 = sphi 0, %s163
      %s167 = sphi 0, %s166
      %s183 = sphi 0, %s167
    $region4: #{tpu_custom_call.1} parent=1 // loop_header_branch
      %26 = sbr.rel (%p24) target = $region8
    $region5: #{tpu_custom_call.1} parent=1 // loop_body
      %s28 = ssub.s32 %s23, 1
      %s29 = ssub.s32 %s23, 2
      %s30 = sadd.s32 %s23, 1
      %s31 = ssub.s32 %s23, %s30
      %p32 = scmp.eq.s32.totalorder %s31, 0
      %s34 = sadd.s32 %s33, 1
      %s35 = scalar_select %p32, %s33, %s34
      %p38 = pneg %p32
      %p39 = scmp.eq.s32.totalorder %s23, 1
      %p40 = por %p38, %p39
      %p41 = scmp.ne.s32.totalorder %s33, %s36
      %p42 = scmp.eq.s32.totalorder %s23, 0
      %p43 = por %p41, %p42
      %p44 = scmp.ne.s32.totalorder %s33, %s36
      %p45 = scmp.eq.s32.totalorder %s28, 1
      %p46 = por %p44, %p45
      %p47 = scmp.ne.s32.totalorder %s36, %s37
      %p48 = scmp.eq.s32.totalorder %s28, 0
      %p49 = por %p47, %p48
      %p50 = scmp.ne.s32.totalorder %s36, %s37
      %p51 = scmp.eq.s32.totalorder %s29, 1
      %p52 = por %p50, %p51
      %p54 = scmp.ne.s32.totalorder %s37, %s53
      %p55 = scmp.eq.s32.totalorder %s29, 0
      %p56 = por %p54, %p55
      %s57 = ssub.s32 %s23, %s30
      %p58 = scmp.eq.s32.totalorder %s57, 0
      %s60 = sadd.s32 %s59, 1
      %s61 = scalar_select %p58, %s59, %s60
      %p64 = pneg %p58
      %p65 = scmp.eq.s32.totalorder %s23, 1
      %p66 = por %p64, %p65
      %p67 = scmp.ne.s32.totalorder %s59, %s62
      %p68 = scmp.eq.s32.totalorder %s23, 0
      %p69 = por %p67, %p68
      %p70 = scmp.ne.s32.totalorder %s59, %s62
      %p71 = scmp.eq.s32.totalorder %s28, 1
      %p72 = por %p70, %p71
      %p73 = scmp.ne.s32.totalorder %s62, %s63
      %p74 = scmp.eq.s32.totalorder %s28, 0
      %p75 = por %p73, %p74
      %p76 = scmp.ne.s32.totalorder %s62, %s63
      %p77 = scmp.eq.s32.totalorder %s29, 1
      %p78 = por %p76, %p77
      %p80 = scmp.ne.s32.totalorder %s63, %s79
      %p81 = scmp.eq.s32.totalorder %s29, 0
      %p82 = por %p80, %p81
      %s83 = ssub.s32 %s23, %s30
      %p84 = scmp.eq.s32.totalorder %s83, 0
      %s86 = sadd.s32 %s85, 1
      %s87 = scalar_select %p84, %s85, %s86
      %p90 = pneg %p84
      %p91 = scmp.eq.s32.totalorder %s23, 1
      %p92 = por %p90, %p91
      %p93 = scmp.ne.s32.totalorder %s85, %s88
      %p94 = scmp.eq.s32.totalorder %s23, 0
      %p95 = por %p93, %p94
      %p96 = scmp.ne.s32.totalorder %s85, %s88
      %p97 = scmp.eq.s32.totalorder %s28, 1
      %p98 = por %p96, %p97
      %p99 = scmp.ne.s32.totalorder %s88, %s89
      %p100 = scmp.eq.s32.totalorder %s28, 0
      %p101 = por %p99, %p100
      %p102 = scmp.ne.s32.totalorder %s88, %s89
      %p103 = scmp.eq.s32.totalorder %s29, 1
      %p104 = por %p102, %p103
      %p106 = scmp.ne.s32.totalorder %s89, %s105
      %p107 = scmp.eq.s32.totalorder %s29, 0
      %p108 = por %p106, %p107
      %s109 = ssub.s32 %s23, %s30
      %p110 = scmp.eq.s32.totalorder %s109, 0
      %s112 = sadd.s32 %s111, 1
      %s113 = scalar_select %p110, %s111, %s112
      %p116 = pneg %p110
      %p117 = scmp.eq.s32.totalorder %s23, 1
      %p118 = por %p116, %p117
      %p119 = scmp.ne.s32.totalorder %s111, %s114
      %p120 = scmp.eq.s32.totalorder %s23, 0
      %p121 = por %p119, %p120
      %p122 = scmp.ne.s32.totalorder %s111, %s114
      %p123 = scmp.eq.s32.totalorder %s28, 1
      %p124 = por %p122, %p123
      %p125 = scmp.ne.s32.totalorder %s114, %s115
      %p126 = scmp.eq.s32.totalorder %s28, 0
      %p127 = por %p125, %p126
      %p128 = scmp.ne.s32.totalorder %s114, %s115
      %p129 = scmp.eq.s32.totalorder %s29, 1
      %p130 = por %p128, %p129
      %p132 = scmp.ne.s32.totalorder %s115, %s131
      %p133 = scmp.eq.s32.totalorder %s29, 0
      %p134 = por %p132, %p133
      %s135 = ssub.s32 %s23, %s30
      %p136 = scmp.eq.s32.totalorder %s135, 0
      %s138 = sadd.s32 %s137, 1
      %s139 = scalar_select %p136, %s137, %s138
      %p142 = pneg %p136
      %p143 = scmp.eq.s32.totalorder %s23, 1
      %p144 = por %p142, %p143
      %p145 = scmp.ne.s32.totalorder %s137, %s140
      %p146 = scmp.eq.s32.totalorder %s23, 0
      %p147 = por %p145, %p146
      %p148 = scmp.ne.s32.totalorder %s137, %s140
      %p149 = scmp.eq.s32.totalorder %s28, 1
      %p150 = por %p148, %p149
      %p151 = scmp.ne.s32.totalorder %s140, %s141
      %p152 = scmp.eq.s32.totalorder %s28, 0
      %p153 = por %p151, %p152
      %p154 = scmp.ne.s32.totalorder %s140, %s141
      %p155 = scmp.eq.s32.totalorder %s29, 1
      %p156 = por %p154, %p155
      %p158 = scmp.ne.s32.totalorder %s141, %s157
      %p159 = scmp.eq.s32.totalorder %s29, 0
      %p160 = por %p158, %p159
      %s161 = ssub.s32 %s23, %s30
      %p162 = scmp.eq.s32.totalorder %s161, 0
      %s164 = sadd.s32 %s163, 1
      %s165 = scalar_select %p162, %s163, %s164
      %p168 = pneg %p162
      %p169 = scmp.eq.s32.totalorder %s23, 1
      %p170 = por %p168, %p169
      %p171 = scmp.ne.s32.totalorder %s163, %s166
      %p172 = scmp.eq.s32.totalorder %s23, 0
      %p173 = por %p171, %p172
      %p174 = scmp.ne.s32.totalorder %s163, %s166
      %p175 = scmp.eq.s32.totalorder %s28, 1
      %p176 = por %p174, %p175
      %p177 = scmp.ne.s32.totalorder %s166, %s167
      %p178 = scmp.eq.s32.totalorder %s28, 0
      %p179 = por %p177, %p178
      %p180 = scmp.ne.s32.totalorder %s166, %s167
      %p181 = scmp.eq.s32.totalorder %s29, 1
      %p182 = por %p180, %p181
      %p184 = scmp.ne.s32.totalorder %s167, %s183
      %p185 = scmp.eq.s32.totalorder %s29, 0
      %p186 = por %p184, %p185
      %p187 = scmp.le.s32.totalorder 1, %s23
      %p188 = scmp.lt.s32.totalorder %s23, 3
      %p189 = pnand %p187, %p188
      %p190 = pneg %p189
      // Predicated region
      $region9: #{tpu_custom_call.1} parent=5 // pred_check
        _
      $region10: #{tpu_custom_call.1} parent=5 // pred_check_branch
        %192 = sbr.rel (%p189) target = $region12
      $region11: #{tpu_custom_call.1} parent=5 // pred_region
        %s193 = ssub.s32 %s23, 1
      $region12: #{tpu_custom_call.1} parent=5 // pred_fallthru
        _
      %p194 = scmp.lt.s32.totalorder %s23, 2
      // Predicated region
      $region13: #{tpu_custom_call.1} parent=5 // pred_check
        %p195 = pneg %p194
      $region14: #{tpu_custom_call.1} parent=5 // pred_check_branch
        %197 = sbr.rel (%p195) target = $region16
      $region15: #{tpu_custom_call.1} parent=5 // pred_region
        // Predicated region
        $region17: #{tpu_custom_call.1} parent=15 // pred_check
          %p198 = pneg %p43
        $region18: #{tpu_custom_call.1} parent=15 // pred_check_branch
          %200 = sbr.rel (%p198) target = $region20
        $region19: #{tpu_custom_call.1} parent=15 // pred_region
          %s201 = sand.u32 %s33, 1
          %s202 = scalar_lea.sflag [#allocation3], %s201
          %s203 = sand.u32 %s33, 1
          %s204 = smul.addr %s203, 32
          %s205 = scalar_lea.vmem [#allocation2], %s204
          %s206 = smul.u32 4, %s23
          %s207 = ssub.s32 6, %s206
          %p208 = scmp.lt.s32.totalorder %s207, 4
          %s209 = scalar_select %p208, %s207, 4
          %s210 = smul.u32 64, %s209
          %s211 = smul.u32 %s210, 2
          %s213 = ssub.s32 512, %s211
          %214 = vsyncadd %s202, %s213
          %p215 = scmp.ne.s32.totalorder 0, %s211
          %s216 = smul.addr %s206, 2
          %s217 = smul.addr %s216, 64
          %s218 = scalar_lea.hbm %s0, %s217
          %s219 = smul.u32 8, %s209
          %s220 = sshll.u32 %s205, 4
          %s221 = int_to_ptr.vmem [resolvable:$true] %s220
          %s222 = sshll.u32 %s219, 4
          %226 = dma.hbm_to_vmem [thread:$0]  (%p215), %s218, %s222, %s221, %s202, 128, 128, 8
        $region20: #{tpu_custom_call.1} parent=15 // pred_fallthru
          _
        // Predicated region
        $region21: #{tpu_custom_call.1} parent=15 // pred_check
          %p227 = pneg %p69
        $region22: #{tpu_custom_call.1} parent=15 // pred_check_branch
          %229 = sbr.rel (%p227) target = $region24
        $region23: #{tpu_custom_call.1} parent=15 // pred_region
          %s230 = sand.u32 %s23, 1
          %s231 = scalar_lea.sflag [#allocation6], %s230
          %s232 = sand.u32 %s59, 1
          %s233 = smul.addr %s232, 32
          %s234 = scalar_lea.vmem [#allocation5], %s233
          %s235 = smul.u32 4, %s23
          %s236 = ssub.s32 6, %s235
          %p237 = scmp.lt.s32.totalorder %s236, 4
          %s238 = scalar_select %p237, %s236, 4
          %s239 = smul.u32 64, %s238
          %s240 = smul.u32 %s239, 2
          %s242 = ssub.s32 512, %s240
          %243 = vsyncadd %s231, %s242
          %p244 = scmp.ne.s32.totalorder 0, %s240
          %s245 = smul.addr %s235, 2
          %s246 = smul.addr %s245, 64
          %s247 = scalar_lea.hbm %s1, %s246
          %s248 = smul.u32 8, %s238
          %s249 = sshll.u32 %s234, 4
          %s250 = int_to_ptr.vmem [resolvable:$true] %s249
          %s251 = sshll.u32 %s248, 4
          %255 = dma.hbm_to_vmem [thread:$0]  (%p244), %s247, %s251, %s250, %s231, 128, 128, 8
        $region24: #{tpu_custom_call.1} parent=15 // pred_fallthru
          _
        // Predicated region
        $region25: #{tpu_custom_call.1} parent=15 // pred_check
          %p256 = pneg %p95
        $region26: #{tpu_custom_call.1} parent=15 // pred_check_branch
          %258 = sbr.rel (%p256) target = $region28
        $region27: #{tpu_custom_call.1} parent=15 // pred_region
          %s259 = sand.u32 %s23, 1
          %s260 = scalar_lea.sflag [#allocation6], %s259
          %s261 = sand.u32 %s85, 1
          %s262 = smul.addr %s261, 32
          %s263 = scalar_lea.vmem [#allocation7], %s262
          %s264 = smul.u32 4, %s23
          %s265 = ssub.s32 6, %s264
          %p266 = scmp.lt.s32.totalorder %s265, 4
          %s267 = scalar_select %p266, %s265, 4
          %s268 = smul.u32 64, %s267
          %s269 = smul.u32 %s268, 2
          %s271 = ssub.s32 512, %s269
          %272 = vsyncadd %s260, %s271
          %p273 = scmp.ne.s32.totalorder 0, %s269
          %s274 = smul.addr %s264, 2
          %s275 = smul.addr %s274, 64
          %s276 = scalar_lea.hbm %s2, %s275
          %s277 = smul.u32 8, %s267
          %s278 = sshll.u32 %s263, 4
          %s279 = int_to_ptr.vmem [resolvable:$true] %s278
          %s280 = sshll.u32 %s277, 4
          %284 = dma.hbm_to_vmem [thread:$0]  (%p273), %s276, %s280, %s279, %s260, 128, 128, 8
        $region28: #{tpu_custom_call.1} parent=15 // pred_fallthru
          _
        // Predicated region
        $region29: #{tpu_custom_call.1} parent=15 // pred_check
          %p285 = pneg %p121
        $region30: #{tpu_custom_call.1} parent=15 // pred_check_branch
          %287 = sbr.rel (%p285) target = $region32
        $region31: #{tpu_custom_call.1} parent=15 // pred_region
          %s288 = sand.u32 %s23, 1
          %s289 = scalar_lea.sflag [#allocation9], %s288
          %s290 = sand.u32 %s111, 1
          %s291 = smul.addr %s290, 32
          %s292 = scalar_lea.vmem [#allocation8], %s291
          %s293 = smul.u32 4, %s23
          %s294 = ssub.s32 6, %s293
          %p295 = scmp.lt.s32.totalorder %s294, 4
          %s296 = scalar_select %p295, %s294, 4
          %s297 = smul.u32 64, %s296
          %s298 = smul.u32 %s297, 2
          %s300 = ssub.s32 512, %s298
          %301 = vsyncadd %s289, %s300
          %p302 = scmp.ne.s32.totalorder 0, %s298
          %s303 = smul.addr %s293, 2
          %s304 = smul.addr %s303, 64
          %s305 = scalar_lea.hbm %s3, %s304
          %s306 = smul.u32 8, %s296
          %s307 = sshll.u32 %s292, 4
          %s308 = int_to_ptr.vmem [resolvable:$true] %s307
          %s309 = sshll.u32 %s306, 4
          %313 = dma.hbm_to_vmem [thread:$0]  (%p302), %s305, %s309, %s308, %s289, 128, 128, 8
        $region32: #{tpu_custom_call.1} parent=15 // pred_fallthru
          _
        // Predicated region
        $region33: #{tpu_custom_call.1} parent=15 // pred_check
          %p314 = pneg %p147
        $region34: #{tpu_custom_call.1} parent=15 // pred_check_branch
          %316 = sbr.rel (%p314) target = $region36
        $region35: #{tpu_custom_call.1} parent=15 // pred_region
          %s317 = sand.u32 %s23, 1
          %s318 = scalar_lea.sflag [#allocation9], %s317
          %s319 = sand.u32 %s137, 1
          %s320 = smul.addr %s319, 16
          %s321 = scalar_lea.vmem [#allocation10], %s320
          %s322 = smul.u32 4, %s23
          %s323 = ssub.s32 6, %s322
          %p324 = scmp.lt.s32.totalorder %s323, 4
          %s325 = scalar_select %p324, %s323, 4
          %s326 = smul.u32 32, %s325
          %s327 = smul.u32 %s326, 2
          %s329 = ssub.s32 256, %s327
          %330 = vsyncadd %s318, %s329
          %p331 = scmp.ne.s32.totalorder 0, %s327
          %s332 = smul.addr %s322, 2
          %s333 = smul.addr %s332, 32
          %s334 = scalar_lea.hbm %s4, %s333
          %s335 = smul.u32 4, %s325
          %s336 = sshll.u32 %s321, 4
          %s337 = int_to_ptr.vmem [resolvable:$true] %s336
          %s338 = sshll.u32 %s335, 4
          %342 = dma.hbm_to_vmem [thread:$0]  (%p331), %s334, %s338, %s337, %s318, 64, 64, 4
        $region36: #{tpu_custom_call.1} parent=15 // pred_fallthru
          _
      $region16: #{tpu_custom_call.1} parent=5 // pred_fallthru
        _
      %p343 = scmp.le.s32.totalorder 1, %s23
      %p344 = scmp.lt.s32.totalorder %s23, 3
      %p345 = pnand %p343, %p344
      %p346 = pneg %p345
      // Predicated region
      $region37: #{tpu_custom_call.1} parent=5 // pred_check
        _
      $region38: #{tpu_custom_call.1} parent=5 // pred_check_branch
        %348 = sbr.rel (%p345) target = $region40
      $region39: #{tpu_custom_call.1} parent=5 // pred_region
        %s349 = ssub.s32 %s23, 1
        %s350 = sand.u32 %s36, 1
        %s351 = scalar_lea.sflag [#allocation3], %s350
        %s352 = sand.u32 %s36, 1
        %s353 = smul.addr %s352, 32
        %s354 = scalar_lea.vmem [#allocation2], %s353
        // Predicated region
        $region41: #{tpu_custom_call.1} parent=39 // pred_check
          %p355 = pneg %p49
        $region42: #{tpu_custom_call.1} parent=39 // pred_check_branch
          %357 = sbr.rel (%p355) target = $region44
        $region43: #{tpu_custom_call.1} parent=39 // pred_region
          %358 = dma.done %s351, 512
        $region44: #{tpu_custom_call.1} parent=39 // pred_fallthru
          _
        %s359 = sand.u32 %s28, 1
        %s360 = scalar_lea.sflag [#allocation6], %s359
        %s361 = sand.u32 %s62, 1
        %s362 = smul.addr %s361, 32
        %s363 = scalar_lea.vmem [#allocation5], %s362
        // Predicated region
        $region45: #{tpu_custom_call.1} parent=39 // pred_check
          %p364 = pneg %p75
        $region46: #{tpu_custom_call.1} parent=39 // pred_check_branch
          %366 = sbr.rel (%p364) target = $region48
        $region47: #{tpu_custom_call.1} parent=39 // pred_region
          %367 = dma.done %s360, 512
        $region48: #{tpu_custom_call.1} parent=39 // pred_fallthru
          _
        %s368 = sand.u32 %s28, 1
        %s369 = scalar_lea.sflag [#allocation6], %s368
        %s370 = sand.u32 %s88, 1
        %s371 = smul.addr %s370, 32
        %s372 = scalar_lea.vmem [#allocation7], %s371
        // Predicated region
        $region49: #{tpu_custom_call.1} parent=39 // pred_check
          %p373 = pneg %p101
        $region50: #{tpu_custom_call.1} parent=39 // pred_check_branch
          %375 = sbr.rel (%p373) target = $region52
        $region51: #{tpu_custom_call.1} parent=39 // pred_region
          %376 = dma.done %s369, 512
        $region52: #{tpu_custom_call.1} parent=39 // pred_fallthru
          _
        %s377 = sand.u32 %s28, 1
        %s378 = scalar_lea.sflag [#allocation9], %s377
        %s379 = sand.u32 %s114, 1
        %s380 = smul.addr %s379, 32
        %s381 = scalar_lea.vmem [#allocation8], %s380
        // Predicated region
        $region53: #{tpu_custom_call.1} parent=39 // pred_check
          %p382 = pneg %p127
        $region54: #{tpu_custom_call.1} parent=39 // pred_check_branch
          %384 = sbr.rel (%p382) target = $region56
        $region55: #{tpu_custom_call.1} parent=39 // pred_region
          %385 = dma.done %s378, 512
        $region56: #{tpu_custom_call.1} parent=39 // pred_fallthru
          _
        %s386 = sand.u32 %s28, 1
        %s387 = scalar_lea.sflag [#allocation9], %s386
        %s388 = sand.u32 %s140, 1
        %s389 = smul.addr %s388, 16
        %s390 = scalar_lea.vmem [#allocation10], %s389
        // Predicated region
        $region57: #{tpu_custom_call.1} parent=39 // pred_check
          %p391 = pneg %p153
        $region58: #{tpu_custom_call.1} parent=39 // pred_check_branch
          %393 = sbr.rel (%p391) target = $region60
        $region59: #{tpu_custom_call.1} parent=39 // pred_region
          %394 = dma.done %s387, 256
        $region60: #{tpu_custom_call.1} parent=39 // pred_fallthru
          _
        %s395 = sand.u32 %s36, 1
        %s396 = scalar_lea.sflag [#allocation3], %s395
        %s397 = sand.u32 %s36, 1
        %s398 = smul.addr %s397, 32
        %s399 = scalar_lea.vmem [#allocation2], %s398
        %p400 = pneg %p49
        %p401 = pneg %p46
        %s402 = sand.u32 %s28, 1
        %s403 = scalar_lea.sflag [#allocation6], %s402
        %s404 = sand.u32 %s62, 1
        %s405 = smul.addr %s404, 32
        %s406 = scalar_lea.vmem [#allocation5], %s405
        %p407 = pneg %p75
        %p408 = pneg %p72
        %s409 = sand.u32 %s28, 1
        %s410 = scalar_lea.sflag [#allocation6], %s409
        %s411 = sand.u32 %s88, 1
        %s412 = smul.addr %s411, 32
        %s413 = scalar_lea.vmem [#allocation7], %s412
        %p414 = pneg %p101
        %p415 = pneg %p98
        %s416 = sand.u32 %s28, 1
        %s417 = scalar_lea.sflag [#allocation9], %s416
        %s418 = sand.u32 %s114, 1
        %s419 = smul.addr %s418, 32
        %s420 = scalar_lea.vmem [#allocation8], %s419
        %p421 = pneg %p127
        %p422 = pneg %p124
        %s423 = sand.u32 %s28, 1
        %s424 = scalar_lea.sflag [#allocation9], %s423
        %s425 = sand.u32 %s140, 1
        %s426 = smul.addr %s425, 16
        %s427 = scalar_lea.vmem [#allocation10], %s426
        %p428 = pneg %p153
        %p429 = pneg %p150
        %p430 = pneg %p179
        %p431 = pneg %p176
        %s432 = sand.u32 %s166, 1
        %s433 = scalar_lea.sflag [#allocation4], %s432
        %s434 = sand.u32 %s166, 1
        %s435 = scalar_lea.vmem [#allocation11], %s434
        %s436 = smul.u32 4, %s28
        %s437 = ssub.s32 6, %s436
        %p438 = scmp.lt.s32.totalorder %s437, 4
        %s439 = scalar_select %p438, %s437, 4
        %s440 = smul.u32 64, %s439
        %s441 = smul.u32 %s440, 2
        %s442 = smul.u32 4, %s28
        %s443 = ssub.s32 6, %s442
        %p444 = scmp.lt.s32.totalorder %s443, 4
        %s445 = scalar_select %p444, %s443, 4
        %s446 = smul.u32 64, %s445
        %s447 = smul.u32 %s446, 2
        %s448 = smul.u32 4, %s28
        %s449 = ssub.s32 6, %s448
        %p450 = scmp.lt.s32.totalorder %s449, 4
        %s451 = scalar_select %p450, %s449, 4
        %s452 = smul.u32 64, %s451
        %s453 = smul.u32 %s452, 2
        %s454 = smul.u32 4, %s28
        %s455 = ssub.s32 6, %s454
        %p456 = scmp.lt.s32.totalorder %s455, 4
        %s457 = scalar_select %p456, %s455, 4
        %s458 = smul.u32 64, %s457
        %s459 = smul.u32 %s458, 2
        %s460 = smul.u32 4, %s28
        %s461 = ssub.s32 6, %s460
        %p462 = scmp.lt.s32.totalorder %s461, 4
        %s463 = scalar_select %p462, %s461, 4
        %s464 = smul.u32 32, %s463
        %s465 = smul.u32 %s464, 2
        %v466 = vld [vmem:[%s390] sm:$0xf]
        %v467 = vld [vmem:[%s390 + $0x4] sm:$0xf]
        %v468 = vld [vmem:[%s390 + $0x8] sm:$0xf]
        %v469 = vld [vmem:[%s390 + $0xc] sm:$0xf]
        %v470 = vunpack.c.0.s8 %v466
        %v471 = vunpack.c.1.s8 %v466
        %v472 = vunpack.c.0.s8 %v467
        %v473 = vunpack.c.1.s8 %v467
        %v474 = vunpack.c.0.s8 %v468
        %v475 = vunpack.c.1.s8 %v468
        %v476 = vunpack.c.0.s8 %v469
        %v477 = vunpack.c.1.s8 %v469
        %v478 = vcvt.s32.f32 %v470
        %v479 = vcvt.s32.f32 %v471
        %v480 = vcvt.s32.f32 %v472
        %v481 = vcvt.s32.f32 %v473
        %v482 = vcvt.s32.f32 %v474
        %v483 = vcvt.s32.f32 %v475
        %v484 = vcvt.s32.f32 %v476
        %v485 = vcvt.s32.f32 %v477
        %v486 = vld [vmem:[%s354] sm:$0xff]
        %v487 = vld [vmem:[%s354 + $0x8] sm:$0xff]
        %v488 = vld [vmem:[%s354 + $0x10] sm:$0xff]
        %v489 = vld [vmem:[%s354 + $0x18] sm:$0xff]
        %v490 = vunpack.c.l.bf16 %v486
        %v491 = vunpack.c.h.bf16 %v486
        %v492 = vunpack.c.l.bf16 %v487
        %v493 = vunpack.c.h.bf16 %v487
        %v494 = vunpack.c.l.bf16 %v488
        %v495 = vunpack.c.h.bf16 %v488
        %v496 = vunpack.c.l.bf16 %v489
        %v497 = vunpack.c.h.bf16 %v489
        %v498 = vld [vmem:[%s363] sm:$0xff]
        %v499 = vld [vmem:[%s363 + $0x8] sm:$0xff]
        %v500 = vld [vmem:[%s363 + $0x10] sm:$0xff]
        %v501 = vld [vmem:[%s363 + $0x18] sm:$0xff]
        %v502 = vunpack.c.l.bf16 %v498
        %v503 = vunpack.c.h.bf16 %v498
        %v504 = vunpack.c.l.bf16 %v499
        %v505 = vunpack.c.h.bf16 %v499
        %v506 = vunpack.c.l.bf16 %v500
        %v507 = vunpack.c.h.bf16 %v500
        %v508 = vunpack.c.l.bf16 %v501
        %v509 = vunpack.c.h.bf16 %v501
        %v510 = vsub.f32 %v490, %v502
        %v511 = vsub.f32 %v491, %v503
        %v512 = vsub.f32 %v492, %v504
        %v513 = vsub.f32 %v493, %v505
        %v514 = vsub.f32 %v494, %v506
        %v515 = vsub.f32 %v495, %v507
        %v516 = vsub.f32 %v496, %v508
        %v517 = vsub.f32 %v497, %v509
        %v518 = vld [vmem:[%s372] sm:$0xff]
        %v519 = vld [vmem:[%s372 + $0x8] sm:$0xff]
        %v520 = vld [vmem:[%s372 + $0x10] sm:$0xff]
        %v521 = vld [vmem:[%s372 + $0x18] sm:$0xff]
        %v522 = vunpack.c.l.bf16 %v518
        %v523 = vunpack.c.h.bf16 %v518
        %v524 = vunpack.c.l.bf16 %v519
        %v525 = vunpack.c.h.bf16 %v519
        %v526 = vunpack.c.l.bf16 %v520
        %v527 = vunpack.c.h.bf16 %v520
        %v528 = vunpack.c.l.bf16 %v521
        %v529 = vunpack.c.h.bf16 %v521
        %v530 = vld [vmem:[%s381] sm:$0xff]
        %v531 = vld [vmem:[%s381 + $0x8] sm:$0xff]
        %v532 = vld [vmem:[%s381 + $0x10] sm:$0xff]
        %v533 = vld [vmem:[%s381 + $0x18] sm:$0xff]
        %v534 = vunpack.c.l.bf16 %v530
        %v535 = vunpack.c.h.bf16 %v530
        %v536 = vunpack.c.l.bf16 %v531
        %v537 = vunpack.c.h.bf16 %v531
        %v538 = vunpack.c.l.bf16 %v532
        %v539 = vunpack.c.h.bf16 %v532
        %v540 = vunpack.c.l.bf16 %v533
        %v541 = vunpack.c.h.bf16 %v533
        %v542 = vsub.f32 %v522, %v534
        %v543 = vsub.f32 %v523, %v535
        %v544 = vsub.f32 %v524, %v536
        %v545 = vsub.f32 %v525, %v537
        %v546 = vsub.f32 %v526, %v538
        %v547 = vsub.f32 %v527, %v539
        %v548 = vsub.f32 %v528, %v540
        %v549 = vsub.f32 %v529, %v541
        %v550 = vmul.f32 %v510, %v510
        %v551 = vmul.f32 %v511, %v511
        %v552 = vmul.f32 %v512, %v512
        %v553 = vmul.f32 %v513, %v513
        %v554 = vmul.f32 %v514, %v514
        %v555 = vmul.f32 %v515, %v515
        %v556 = vmul.f32 %v516, %v516
        %v557 = vmul.f32 %v517, %v517
        %v558 = vmul.f32 %v550, %v478
        %v559 = vmul.f32 %v551, %v479
        %v560 = vmul.f32 %v552, %v480
        %v561 = vmul.f32 %v553, %v481
        %v562 = vmul.f32 %v554, %v482
        %v563 = vmul.f32 %v555, %v483
        %v564 = vmul.f32 %v556, %v484
        %v565 = vmul.f32 %v557, %v485
        %v566 = vmul.f32 %v542, %v542
        %v567 = vmul.f32 %v543, %v543
        %v568 = vmul.f32 %v544, %v544
        %v569 = vmul.f32 %v545, %v545
        %v570 = vmul.f32 %v546, %v546
        %v571 = vmul.f32 %v547, %v547
        %v572 = vmul.f32 %v548, %v548
        %v573 = vmul.f32 %v549, %v549
        %v574 = vmul.f32 %v566, %v478
        %v575 = vmul.f32 %v567, %v479
        %v576 = vmul.f32 %v568, %v480
        %v577 = vmul.f32 %v569, %v481
        %v578 = vmul.f32 %v570, %v482
        %v579 = vmul.f32 %v571, %v483
        %v580 = vmul.f32 %v572, %v484
        %v581 = vmul.f32 %v573, %v485
        %s582 = smul.u32 %s28, 32
        %v583 = vlaneseq
        %v584 = vshrl.u32 %v583, 7
        %v585 = vadd.s32 %v584, 8
        %v586 = vadd.s32 %v584, 16
        %v587 = vadd.s32 %v584, 24
        %v588 = vstv %s582
        %v589 = vadd.s32 %v588, %v584
        %v590 = vadd.s32 %v588, %v585
        %v591 = vadd.s32 %v588, %v586
        %v592 = vadd.s32 %v588, %v587
        %vm593 = vcmp.lt.s32.totalorder %v589, 48
        %vm594 = vcmp.lt.s32.totalorder %v590, 48
        %vm595 = vcmp.lt.s32.totalorder %v591, 48
        %vm596 = vcmp.lt.s32.totalorder %v592, 48
        %v597 = vsel %vm593, %v558, 0.0
        %v598 = vsel %vm593, %v559, 0.0
        %v599 = vsel %vm594, %v560, 0.0
        %v600 = vsel %vm594, %v561, 0.0
        %v601 = vsel %vm595, %v562, 0.0
        %v602 = vsel %vm595, %v563, 0.0
        %v603 = vsel %vm596, %v564, 0.0
        %v604 = vsel %vm596, %v565, 0.0
        %v605 = vsel %vm593, %v574, 0.0
        %v606 = vsel %vm593, %v575, 0.0
        %v607 = vsel %vm594, %v576, 0.0
        %v608 = vsel %vm594, %v577, 0.0
        %v609 = vsel %vm595, %v578, 0.0
        %v610 = vsel %vm595, %v579, 0.0
        %v611 = vsel %vm596, %v580, 0.0
        %v612 = vsel %vm596, %v581, 0.0
        %v613 = vadd.f32 %v597, %v598
        %v614 = vadd.f32 %v613, %v599
        %v615 = vadd.f32 %v614, %v600
        %v616 = vadd.f32 %v615, %v601
        %v617 = vadd.f32 %v616, %v602
        %v618 = vadd.f32 %v617, %v603
        %v619 = vadd.f32 %v618, %v604
        %620 = vadd.xlane.f32.xlu0 %v619
        %v621 = vpop.xlane.xlu0 %620
        %v622 = vrot.slane %v621, 4
        %v623 = vadd.f32 %v621, %v622
        %v624 = vrot.slane %v623, 2
        %v625 = vadd.f32 %v623, %v624
        %v626 = vrot.slane %v625, 1
        %v627 = vadd.f32 %v625, %v626
        %s628 = vtos %v627
        %v629 = vadd.f32 %v605, %v606
        %v630 = vadd.f32 %v629, %v607
        %v631 = vadd.f32 %v630, %v608
        %v632 = vadd.f32 %v631, %v609
        %v633 = vadd.f32 %v632, %v610
        %v634 = vadd.f32 %v633, %v611
        %v635 = vadd.f32 %v634, %v612
        %636 = vadd.xlane.f32.xlu0 %v635
        %v637 = vpop.xlane.xlu0 %636
        %v638 = vrot.slane %v637, 4
        %v639 = vadd.f32 %v637, %v638
        %v640 = vrot.slane %v639, 2
        %v641 = vadd.f32 %v639, %v640
        %v642 = vrot.slane %v641, 1
        %v643 = vadd.f32 %v641, %v642
        %s644 = vtos %v643
        %v645 = vlaneseq
        %v646 = vand.u32 %v645, 127
        %vm647 = vcmp.eq.s32.totalorder %v646, 0
        %vm648 = vcmp.eq.s32.totalorder %v646, 1
        %v649 = vstv %s644
        %v650 = vsel %vm648, %v649, 0.0
        %v651 = vstv %s628
        %v652 = vsel %vm647, %v651, %v650
        %653 = vst [vmem:[%s435] sm:$0x1] %v652
        %s654 = sand.u32 %s166, 1
        %s655 = scalar_lea.sflag [#allocation4], %s654
        %s656 = sand.u32 %s166, 1
        %s657 = scalar_lea.vmem [#allocation11], %s656
        // Predicated region
        $region61: #{tpu_custom_call.1} parent=39 // pred_check
          %p658 = pneg %p176
        $region62: #{tpu_custom_call.1} parent=39 // pred_check_branch
          %660 = sbr.rel (%p658) target = $region64
        $region63: #{tpu_custom_call.1} parent=39 // pred_region
          %s662 = ssub.s32 16, 16
          %663 = vsyncadd %s655, %s662
          %s664 = smul.addr %s28, 16
          %s665 = scalar_lea.hbm %s5, %s664
          %s667 = sshll.u32 %s657, 4
          %s668 = int_to_ptr.vmem [resolvable:$true] %s667
          %670 = dma.vmem_to_hbm [thread:$0]  %s668, 16, %s665, %s655
        $region64: #{tpu_custom_call.1} parent=39 // pred_fallthru
          _
      $region40: #{tpu_custom_call.1} parent=5 // pred_fallthru
        _
      %p671 = scmp.le.s32.totalorder 2, %s23
      // Predicated region
      $region65: #{tpu_custom_call.1} parent=5 // pred_check
        %p672 = pneg %p671
      $region66: #{tpu_custom_call.1} parent=5 // pred_check_branch
        %674 = sbr.rel (%p672) target = $region68
      $region67: #{tpu_custom_call.1} parent=5 // pred_region
        %s675 = ssub.s32 %s23, 2
        // Predicated region
        $region69: #{tpu_custom_call.1} parent=67 // pred_check
          %p676 = pneg %p182
        $region70: #{tpu_custom_call.1} parent=67 // pred_check_branch
          %678 = sbr.rel (%p676) target = $region72
        $region71: #{tpu_custom_call.1} parent=67 // pred_region
          %s679 = sand.u32 %s167, 1
          %s680 = scalar_lea.sflag [#allocation4], %s679
          %s681 = sand.u32 %s167, 1
          %s682 = scalar_lea.vmem [#allocation11], %s681
          %683 = dma.done %s680, 16
        $region72: #{tpu_custom_call.1} parent=67 // pred_fallthru
          _
      $region68: #{tpu_custom_call.1} parent=5 // pred_fallthru
        _
    $region6: #{tpu_custom_call.1} parent=1 // loop_footer
      %s27 = sadd.s32 1, %s23
    $region7: #{tpu_custom_call.1} parent=1 // loop_footer_branch
      %22 = sbr.rel target = $region3
    $region8: #{tpu_custom_call.1} parent=1 // loop_exit
      _
    %684 = vsyncpa [#allocation3], 1
    %s685 = scalar_lea.sflag [#allocation3], 1
    %686 = vsyncpa %s685, 1
    %687 = vsyncpa [#allocation6], 1
    %s688 = scalar_lea.sflag [#allocation6], 1
    %689 = vsyncpa %s688, 1
    %690 = vsyncpa [#allocation9], 1
    %s691 = scalar_lea.sflag [#allocation9], 1
    %692 = vsyncpa %s691, 1
    %693 = vsyncpa [#allocation4], 1
    %s694 = scalar_lea.sflag [#allocation4], 1
    %695 = vsyncpa %s694, 1

</llo_original>
